<compile_context>
chip_gen: v5e
topology: v5e:2x2
jax: 0.10.0
libtpu: 0.0.40
codegen_flags: <defaults>
</compile_context>

<pallas_src>
import jax
import jax.numpy as jnp
from jax.experimental import pallas as pl
from jax.experimental.pallas import tpu as pltpu

EPS = 1e-5
EXPANSION = 4
LANE = 128            # channel (lane) alignment
ROW_TILE_CAP = 1024   # max rows per grid step for row-tiled kernels
STRIP_ROWS_CAP = 8    # output rows (Ho) per conv2 grid step


# ------------------------------- small utils -------------------------------

def _round_up(x, m):
    return (x + m - 1) // m * m


_VMEM_LIMIT_CACHE = None


def _vmem_limit_bytes():
    # Derive the scoped-VMEM limit from the actual chip (v5e/v6e: 128 MiB,
    # v7x: 64 MiB) and leave headroom for compiler-internal scratch.
    global _VMEM_LIMIT_CACHE
    if _VMEM_LIMIT_CACHE is None:
        try:
            phys = pltpu.get_tpu_info().vmem_capacity_bytes
        except Exception:
            phys = 64 * 1024 * 1024
        _VMEM_LIMIT_CACHE = int(min(max(phys - 16 * 1024 * 1024,
                                        32 * 1024 * 1024),
                                    96 * 1024 * 1024))
    return _VMEM_LIMIT_CACHE


def _cparams(n_axes):
    return pltpu.CompilerParams(
        dimension_semantics=("parallel",) * n_axes,
        vmem_limit_bytes=_vmem_limit_bytes(),
    )


def _pick_row_tile(rows, row_bytes):
    # Keep each streaming tile around <= 4 MiB (x2 double buffering).
    cap = (4 * 1024 * 1024) // max(row_bytes, 1)
    cap = max(8, min(ROW_TILE_CAP, cap // 8 * 8))
    return min(cap, _round_up(rows, 8))


def _pick_strip(ho):
    # Largest divisor of Ho that is <= STRIP_ROWS_CAP (so strips tile exactly).
    best = 1
    for t in range(1, ho + 1):
        if t <= STRIP_ROWS_CAP and ho % t == 0:
            best = t
    return best


def _pad2d(x, rows, cols):
    r, c = x.shape
    return jnp.pad(x, ((0, rows - r), (0, cols - c)))


def _bn_affine(stats, count, gamma_p, beta_p):
    # stats: (2, C) = [sum, sum of squares] over `count` real rows (f32).
    mean = stats[0] / count
    var = jnp.maximum(stats[1] / count - mean * mean, 0.0)   # biased variance
    scale = gamma_p * jax.lax.rsqrt(var + EPS)
    shift = beta_p - mean * scale
    return scale[None, :], shift[None, :]


# ------------------------------ Pallas kernels ------------------------------

def _matmul_stats_kernel(x_ref, w_ref, y_ref, st_ref):
    # y = x @ w (bf16 in, f32 acc); store y as bf16 + per-tile [sum, sum_sq].
    y = jnp.dot(x_ref[...], w_ref[...], preferred_element_type=jnp.float32)
    y_ref[...] = y.astype(y_ref.dtype)
    st_ref[0, 0:1, :] = jnp.sum(y, axis=0, keepdims=True)
    st_ref[0, 1:2, :] = jnp.sum(y * y, axis=0, keepdims=True)


def _make_conv2_kernel(n_phases, taps, phase_off, stride, Th, Wo, max_d, H, W):
    # 3x3 conv with BN1 affine + ReLU fused on the input slabs (border masked
    # back to zero after the affine), one widened K=9*C matmul per strip,
    # per-strip partial BN2 stats.
    def kernel(*refs):
        phase_refs = refs[:n_phases]
        w_ref = refs[n_phases]           # (9*C, Co)  bf16
        sc_ref = refs[n_phases + 1]      # (1, C)     f32  BN1 scale
        sh_ref = refs[n_phases + 2]      # (1, C)     f32  BN1 shift
        y_ref = refs[n_phases + 3]       # (1, Th, Wo, Co) bf16
        st_ref = refs[n_phases + 4]      # (1, 2, Co) f32
        s = pl.program_id(1)
        row0 = s * Th
        sc = sc_ref[...].reshape(1, 1, -1)
        sh = sh_ref[...].reshape(1, 1, -1)
        rows = Th + max_d

        slabs = []
        for ph in range(n_phases):
            r, c = phase_off[ph]
            raw = phase_refs[ph][0, pl.ds(row0, rows), :, :]    # (rows, Wq, C)
            wq = raw.shape[1]
            li = jax.lax.broadcasted_iota(jnp.int32, (rows, wq, 1), 0)
            lj = jax.lax.broadcasted_iota(jnp.int32, (rows, wq, 1), 1)
            hpix = stride * (row0 + li) + r          # padded-image row coord
            wpix = stride * lj + c                   # padded-image col coord
            valid = (hpix >= 1) & (hpix <= H) & (wpix >= 1) & (wpix <= W)
            h = jnp.maximum(raw * sc + sh, 0.0)      # BN1 affine + ReLU (f32)
            slabs.append(jnp.where(valid, h, 0.0).astype(jnp.bfloat16))

        # Widened contraction: concat the 9 shifted tap windows along channels
        # so the MXU sees K = 9*C and accumulates internally.
        cols = [slabs[pi][dh:dh + Th, dw:dw + Wo, :] for (pi, dh, dw) in taps]
        big = jnp.concatenate(cols, axis=-1)                    # (Th, Wo, 9*C)
        y = jnp.dot(big.reshape(Th * Wo, big.shape[-1]), w_ref[...],
                    preferred_element_type=jnp.float32)         # (Th*Wo, Co)
        y_ref[0] = y.reshape(Th, Wo, -1).astype(y_ref.dtype)
        st_ref[0, 0:1, :] = jnp.sum(y, axis=0, keepdims=True)
        st_ref[0, 1:2, :] = jnp.sum(y * y, axis=0, keepdims=True)
    return kernel


def _make_tail_proj_kernel(tm, r_valid):
    # Fused: BN2 affine + ReLU on raw conv2 output (padded rows masked to 0),
    # conv3 matmul, shortcut conv matmul, partial BN3 / BNsc stats.
    def kernel(y2_ref, sc2_ref, sh2_ref, w3_ref, xs_ref, wsc_ref,
               y3_ref, ysc_ref, st_ref):
        i = pl.program_id(0)
        h2 = jnp.maximum(y2_ref[...] * sc2_ref[...] + sh2_ref[...], 0.0)
        row = jax.lax.broadcasted_iota(jnp.int32, (tm, 1), 0) + i * tm
        h2 = jnp.where(row < r_valid, h2, 0.0)
        y3 = jnp.dot(h2.astype(jnp.bfloat16), w3_ref[...],
                     preferred_element_type=jnp.float32)
        ysc = jnp.dot(xs_ref[...], wsc_ref[...],
                      preferred_element_type=jnp.float32)
        y3_ref[...] = y3.astype(y3_ref.dtype)
        ysc_ref[...] = ysc.astype(ysc_ref.dtype)
        st_ref[0, 0:1, :] = jnp.sum(y3, axis=0, keepdims=True)
        st_ref[0, 1:2, :] = jnp.sum(y3 * y3, axis=0, keepdims=True)
        st_ref[0, 2:3, :] = jnp.sum(ysc, axis=0, keepdims=True)
        st_ref[0, 3:4, :] = jnp.sum(ysc * ysc, axis=0, keepdims=True)
    return kernel


def _make_tail_main_kernel(tm, r_valid):
    def kernel(y2_ref, sc2_ref, sh2_ref, w3_ref, y3_ref, st_ref):
        i = pl.program_id(0)
        h2 = jnp.maximum(y2_ref[...] * sc2_ref[...] + sh2_ref[...], 0.0)
        row = jax.lax.broadcasted_iota(jnp.int32, (tm, 1), 0) + i * tm
        h2 = jnp.where(row < r_valid, h2, 0.0)
        y3 = jnp.dot(h2.astype(jnp.bfloat16), w3_ref[...],
                     preferred_element_type=jnp.float32)
        y3_ref[...] = y3.astype(y3_ref.dtype)
        st_ref[0, 0:1, :] = jnp.sum(y3, axis=0, keepdims=True)
        st_ref[0, 1:2, :] = jnp.sum(y3 * y3, axis=0, keepdims=True)
    return kernel


def _residual_proj_kernel(y3_ref, s3_ref, b3_ref, ysc_ref, ssc_ref, bsc_ref, o_ref):
    main = y3_ref[...] * s3_ref[...] + b3_ref[...]
    sc = ysc_ref[...] * ssc_ref[...] + bsc_ref[...]
    o_ref[...] = jnp.maximum(main + sc, 0.0)


def _residual_id_kernel(y3_ref, s3_ref, b3_ref, x_ref, o_ref):
    o_ref[...] = jnp.maximum(y3_ref[...] * s3_ref[...] + b3_ref[...] + x_ref[...], 0.0)


# ------------------------------ kernel wrappers ------------------------------

def matmul_with_stats(x, w, tm):
    Rp, K = x.shape
    N = w.shape[1]
    nt = Rp // tm
    return pl.pallas_call(
        _matmul_stats_kernel,
        grid=(nt,),
        in_specs=[pl.BlockSpec((tm, K), lambda i: (i, 0)),
                  pl.BlockSpec((K, N), lambda i: (0, 0))],
        out_specs=(pl.BlockSpec((tm, N), lambda i: (i, 0)),
                   pl.BlockSpec((1, 2, N), lambda i: (i, 0, 0))),
        out_shape=(jax.ShapeDtypeStruct((Rp, N), jnp.bfloat16),
                   jax.ShapeDtypeStruct((nt, 2, N), jnp.float32)),
        compiler_params=_cparams(1),
    )(x, w)


def conv2_fused(phases, w_flat, sc1, sh1, Ho, Wo, taps, phase_off,
                stride, Th, max_d, H, W):
    N, Hq, Wq, C = phases[0].shape
    C9, Co = w_flat.shape
    n_ph = len(phases)
    n_strips = Ho // Th
    kernel = _make_conv2_kernel(n_ph, taps, phase_off, stride, Th, Wo, max_d, H, W)
    phase_spec = pl.BlockSpec((1, Hq, Wq, C), lambda n, s: (n, 0, 0, 0))
    in_specs = ([phase_spec] * n_ph
                + [pl.BlockSpec((C9, Co), lambda n, s: (0, 0)),
                   pl.BlockSpec((1, C), lambda n, s: (0, 0)),
                   pl.BlockSpec((1, C), lambda n, s: (0, 0))])
    out_specs = (pl.BlockSpec((1, Th, Wo, Co), lambda n, s: (n, s, 0, 0)),
                 pl.BlockSpec((1, 2, Co), lambda n, s: (n * n_strips + s, 0, 0)))
    return pl.pallas_call(
        kernel,
        grid=(N, n_strips),
        in_specs=in_specs,
        out_specs=out_specs,
        out_shape=(jax.ShapeDtypeStruct((N, Ho, Wo, Co), jnp.bfloat16),
                   jax.ShapeDtypeStruct((N * n_strips, 2, Co), jnp.float32)),
        compiler_params=_cparams(2),
    )(*phases, w_flat, sc1, sh1)


def tail_proj_matmuls(y2, sc2, sh2, w3, xs, wsc, tm, r_valid):
    Rp, Cm = y2.shape
    Ce = w3.shape[1]
    Ci = xs.shape[1]
    nt = Rp // tm
    kernel = _make_tail_proj_kernel(tm, r_valid)
    return pl.pallas_call(
        kernel,
        grid=(nt,),
        in_specs=[pl.BlockSpec((tm, Cm), lambda i: (i, 0)),
                  pl.BlockSpec((1, Cm), lambda i: (0, 0)),
                  pl.BlockSpec((1, Cm), lambda i: (0, 0)),
                  pl.BlockSpec((Cm, Ce), lambda i: (0, 0)),
                  pl.BlockSpec((tm, Ci), lambda i: (i, 0)),
                  pl.BlockSpec((Ci, Ce), lambda i: (0, 0))],
        out_specs=(pl.BlockSpec((tm, Ce), lambda i: (i, 0)),
                   pl.BlockSpec((tm, Ce), lambda i: (i, 0)),
                   pl.BlockSpec((1, 4, Ce), lambda i: (i, 0, 0))),
        out_shape=(jax.ShapeDtypeStruct((Rp, Ce), jnp.bfloat16),
                   jax.ShapeDtypeStruct((Rp, Ce), jnp.bfloat16),
                   jax.ShapeDtypeStruct((nt, 4, Ce), jnp.float32)),
        compiler_params=_cparams(1),
    )(y2, sc2, sh2, w3, xs, wsc)


def tail_main_matmul(y2, sc2, sh2, w3, tm, r_valid):
    Rp, Cm = y2.shape
    Ce = w3.shape[1]
    nt = Rp // tm
    kernel = _make_tail_main_kernel(tm, r_valid)
    return pl.pallas_call(
        kernel,
        grid=(nt,),
        in_specs=[pl.BlockSpec((tm, Cm), lambda i: (i, 0)),
                  pl.BlockSpec((1, Cm), lambda i: (0, 0)),
                  pl.BlockSpec((1, Cm), lambda i: (0, 0)),
                  pl.BlockSpec((Cm, Ce), lambda i: (0, 0))],
        out_specs=(pl.BlockSpec((tm, Ce), lambda i: (i, 0)),
                   pl.BlockSpec((1, 2, Ce), lambda i: (i, 0, 0))),
        out_shape=(jax.ShapeDtypeStruct((Rp, Ce), jnp.bfloat16),
                   jax.ShapeDtypeStruct((nt, 2, Ce), jnp.float32)),
        compiler_params=_cparams(1),
    )(y2, sc2, sh2, w3)


def residual_proj(y3, s3, b3, ysc, ssc, bsc, tm):
    Rp, Ce = y3.shape
    nt = Rp // tm
    return pl.pallas_call(
        _residual_proj_kernel,
        grid=(nt,),
        in_specs=[pl.BlockSpec((tm, Ce), lambda i: (i, 0)),
                  pl.BlockSpec((1, Ce), lambda i: (0, 0)),
                  pl.BlockSpec((1, Ce), lambda i: (0, 0)),
                  pl.BlockSpec((tm, Ce), lambda i: (i, 0)),
                  pl.BlockSpec((1, Ce), lambda i: (0, 0)),
                  pl.BlockSpec((1, Ce), lambda i: (0, 0))],
        out_specs=pl.BlockSpec((tm, Ce), lambda i: (i, 0)),
        out_shape=jax.ShapeDtypeStruct((Rp, Ce), jnp.float32),
        compiler_params=_cparams(1),
    )(y3, s3, b3, ysc, ssc, bsc)


def residual_identity(y3, s3, b3, x_id, tm):
    Rp, Ce = y3.shape
    nt = Rp // tm
    return pl.pallas_call(
        _residual_id_kernel,
        grid=(nt,),
        in_specs=[pl.BlockSpec((tm, Ce), lambda i: (i, 0)),
                  pl.BlockSpec((1, Ce), lambda i: (0, 0)),
                  pl.BlockSpec((1, Ce), lambda i: (0, 0)),
                  pl.BlockSpec((tm, Ce), lambda i: (i, 0))],
        out_specs=pl.BlockSpec((tm, Ce), lambda i: (i, 0)),
        out_shape=jax.ShapeDtypeStruct((Rp, Ce), jnp.float32),
        compiler_params=_cparams(1),
    )(y3, s3, b3, x_id)


# ---------------------------------- forward ----------------------------------

def init_params(key, in_ch, out_ch, stride):
    ks = jax.random.split(key, 4)
    co = out_ch
    ce = EXPANSION * out_ch
    p = {
        "w1": jax.random.normal(ks[0], (co, in_ch, 1, 1), jnp.float32) * 0.1,
        "g1": jnp.ones((co,), jnp.float32), "b1": jnp.zeros((co,), jnp.float32),
        "w2": jax.random.normal(ks[1], (co, co, 3, 3), jnp.float32) * 0.1,
        "g2": jnp.ones((co,), jnp.float32), "b2": jnp.zeros((co,), jnp.float32),
        "w3": jax.random.normal(ks[2], (ce, co, 1, 1), jnp.float32) * 0.1,
        "g3": jnp.ones((ce,), jnp.float32), "b3": jnp.zeros((ce,), jnp.float32),
    }
    if stride != 1 or in_ch != ce:
        p["wsc"] = jax.random.normal(ks[3], (ce, in_ch, 1, 1), jnp.float32) * 0.1
        p["gsc"] = jnp.ones((ce,), jnp.float32)
        p["bsc"] = jnp.zeros((ce,), jnp.float32)
    return p


def bottleneck_forward(x_nchw, p, stride):
    assert stride in (1, 2), "ResNet bottleneck uses stride 1 or 2"
    N, Cin, H, W = x_nchw.shape
    Cmid = p["w1"].shape[0]
    Cexp = p["w3"].shape[0]
    Cin_p = _round_up(Cin, LANE)
    Cm_p = _round_up(Cmid, LANE)
    Ce_p = _round_up(Cexp, LANE)
    Ho = (H + 2 - 3) // stride + 1
    Wo = (W + 2 - 3) // stride + 1

    x_nhwc = jnp.transpose(x_nchw, (0, 2, 3, 1)).astype(jnp.float32)

    # Channel-padded bf16 weights (MXU operands), f32 BN params.
    w1 = _pad2d(p["w1"][:, :, 0, 0].T, Cin_p, Cm_p).astype(jnp.bfloat16)
    w3 = _pad2d(p["w3"][:, :, 0, 0].T, Cm_p, Ce_p).astype(jnp.bfloat16)
    w2_flat = jnp.concatenate(
        [_pad2d(p["w2"][:, :, kh, kw].T, Cm_p, Cm_p)
         for kh in range(3) for kw in range(3)], axis=0).astype(jnp.bfloat16)
    g1 = jnp.pad(p["g1"], (0, Cm_p - Cmid)); b1 = jnp.pad(p["b1"], (0, Cm_p - Cmid))
    g2 = jnp.pad(p["g2"], (0, Cm_p - Cmid)); b2 = jnp.pad(p["b2"], (0, Cm_p - Cmid))
    g3 = jnp.pad(p["g3"], (0, Ce_p - Cexp)); b3 = jnp.pad(p["b3"], (0, Ce_p - Cexp))

    # ---- stage 1: 1x1 conv (+BN1 partial stats); y1 stored bf16 -------------
    R1 = N * H * W
    tm1 = _pick_row_tile(R1, 2 * (Cin_p + Cm_p))
    R1p = _round_up(R1, tm1)
    x_flat = jnp.pad(x_nhwc.reshape(R1, Cin), ((0, R1p - R1), (0, Cin_p - Cin)))
    y1, st1 = matmul_with_stats(x_flat.astype(jnp.bfloat16), w1, tm1)
    sc1, sh1 = _bn_affine(jnp.sum(st1, axis=0), R1, g1, b1)

    # ---- stage 2: 3x3 conv with fused BN1 affine + ReLU on the input --------
    y1_img = y1[:R1].reshape(N, H, W, Cm_p)
    y1_pad = jnp.pad(y1_img, ((0, 0), (1, 1), (1, 1), (0, 0)))   # masked in-kernel

    Th = _pick_strip(Ho)
    n_strips = Ho // Th
    if stride == 1:
        max_d = 2
        phase_off = [(0, 0)]
        taps = [(0, kh, kw) for kh in range(3) for kw in range(3)]
        raw_phases = [y1_pad]
    else:
        max_d = 1
        phase_off = [(r, c) for r in range(2) for c in range(2)]
        taps = [(2 * (kh % 2) + (kw % 2), kh // 2, kw // 2)
                for kh in range(3) for kw in range(3)]
        raw_phases = [y1_pad[:, r::2, c::2, :] for (r, c) in phase_off]

    rows_need = n_strips * Th + max_d
    cols_need = Wo + max_d
    phases = []
    for ph in raw_phases:
        ph = ph[:, :rows_need, :cols_need, :]
        ph = jnp.pad(ph, ((0, 0), (0, rows_need - ph.shape[1]),
                          (0, cols_need - ph.shape[2]), (0, 0)))
        phases.append(ph)

    y2, st2 = conv2_fused(phases, w2_flat, sc1, sh1, Ho, Wo, taps, phase_off,
                          stride, Th, max_d, H, W)
    R2 = N * Ho * Wo
    sc2, sh2 = _bn_affine(jnp.sum(st2, axis=0), R2, g2, b2)

    # ---- stage 3: BN2+ReLU folded into conv3 (+shortcut), BN3, add, ReLU ----
    row_bytes = 2 * Cm_p + 4 * Ce_p + (2 * Cin_p if "wsc" in p else 0)
    tm2 = _pick_row_tile(R2, row_bytes)
    R2p = _round_up(R2, tm2)
    y2f = jnp.pad(y2.reshape(R2, Cm_p), ((0, R2p - R2), (0, 0)))   # bf16

    if "wsc" in p:
        wsc = _pad2d(p["wsc"][:, :, 0, 0].T, Cin_p, Ce_p).astype(jnp.bfloat16)
        gsc = jnp.pad(p["gsc"], (0, Ce_p - Cexp))
        bsc = jnp.pad(p["bsc"], (0, Ce_p - Cexp))
        xs = x_nhwc[:, ::stride, ::stride, :][:, :Ho, :Wo, :]
        xsf = jnp.pad(xs.reshape(R2, Cin),
                      ((0, R2p - R2), (0, Cin_p - Cin))).astype(jnp.bfloat16)
        y3, ysc, st3 = tail_proj_matmuls(y2f, sc2, sh2, w3, xsf, wsc, tm2, R2)
        st3s = jnp.sum(st3, axis=0)
        sc3, sh3 = _bn_affine(st3s[0:2], R2, g3, b3)
        scs, shs = _bn_affine(st3s[2:4], R2, gsc, bsc)
        out = residual_proj(y3, sc3, sh3, ysc, scs, shs, tm2)
    else:
        # identity shortcut: guaranteed stride == 1 and Cin == 4*out_ch
        y3, st3 = tail_main_matmul(y2f, sc2, sh2, w3, tm2, R2)
        sc3, sh3 = _bn_affine(jnp.sum(st3, axis=0), R2, g3, b3)
        x_id = jnp.pad(x_nhwc.reshape(R2, Cin),
                       ((0, R2p - R2), (0, Ce_p - Cin)))
        out = residual_identity(y3, sc3, sh3, x_id, tm2)

    out = out[:R2, :Cexp].reshape(N, Ho, Wo, Cexp)
    return jnp.transpose(out, (0, 3, 1, 2))                        # NCHW


# ------------------------------ reference (sanity) ---------------------------

def _ref_forward(x, p, stride):
    bf = jnp.bfloat16

    def conv(z, w, s, pad):
        # Mirror the kernel's bf16 MXU operands (f32 accumulation).
        return jax.lax.conv_general_dilated(
            z.astype(bf), w.astype(bf), (s, s), [(pad, pad), (pad, pad)],
            dimension_numbers=("NCHW", "OIHW", "NCHW"),
            preferred_element_type=jnp.float32)

    def bn(z, g, b):
        m = jnp.mean(z, axis=(0, 2, 3), keepdims=True)
        v = jnp.mean((z - m) ** 2, axis=(0, 2, 3), keepdims=True)
        return ((z - m) * jax.lax.rsqrt(v + EPS)
                * g[None, :, None, None] + b[None, :, None, None])

    out = jax.nn.relu(bn(conv(x, p["w1"], 1, 0), p["g1"], p["b1"]))
    out = jax.nn.relu(bn(conv(out, p["w2"], stride, 1), p["g2"], p["b2"]))
    out = bn(conv(out, p["w3"], 1, 0), p["g3"], p["b3"])
    if "wsc" in p:
        sc = bn(conv(x, p["wsc"], stride, 0), p["gsc"], p["bsc"])
    else:
        sc = x
    return jax.nn.relu(out + sc)


# ----------------------------------- main ------------------------------------

if __name__ == "__main__":
    configs = [
        (4, 4, 2),    # projection shortcut, stride 2 (phase-split conv2 path)
        (16, 4, 1),   # identity shortcut, stride 1 (multi-strip conv2 path)
    ]
    root = jax.random.PRNGKey(0)
    for idx, (cin, cout, stride) in enumerate(configs):
        kx, kp = jax.random.split(jax.random.fold_in(root, idx))
        x = jax.random.normal(kx, (2, cin, 16, 16), jnp.float32)
        params = init_params(kp, cin, cout, stride)

        y = jax.block_until_ready(bottleneck_forward(x, params, stride))
        y_ref = jax.block_until_ready(_ref_forward(x, params, stride))

        Ho = (16 + 2 - 3) // stride + 1
        assert y.shape == (2, EXPANSION * cout, Ho, Ho), y.shape
        err = float(jnp.max(jnp.abs(y - y_ref)))
        # bf16 MXU operands + bf16 HBM intermediates -> bf16-sized tolerance.
        assert jnp.allclose(y, y_ref, rtol=3e-2, atol=3e-2), err

    print("KERNEL_OK")
</pallas_src>

<mosaic_0001>
module attributes {stable_mosaic.version = 11 : i64} {
  func.func @_matmul_stats_kernel(%arg0: i32, %arg1: memref<512x128xbf16, #tpu.memory_space<vmem>>, %arg2: memref<128x128xbf16, #tpu.memory_space<vmem>>, %arg3: memref<512x128xbf16, #tpu.memory_space<vmem>>, %arg4: memref<1x2x128xf32, #tpu.memory_space<vmem>>) attributes {dimension_semantics = [#tpu.dimension_semantics<parallel>], iteration_bounds = array<i64: 1>, scalar_prefetch = 0 : i64, scratch_operands = 0 : i64, tpu.core_type = #tpu.core_type<tc>, window_params = [{transform_indices = @transform_0, window_bounds = array<i64: 512, 128>}, {pipeline_mode = #tpu.pipeline_mode<synchronous>, transform_indices = @transform_1, window_bounds = array<i64: 128, 128>}, {transform_indices = @transform_2, window_bounds = array<i64: 512, 128>}, {transform_indices = @transform_3, window_bounds = array<i64: 1, 2, 128>}]} {
    %c0 = arith.constant 0 : index
    %c0_0 = arith.constant 0 : index
    %0 = vector.load %arg1[%c0, %c0_0] : memref<512x128xbf16, #tpu.memory_space<vmem>>, vector<512x128xbf16>
    %c0_1 = arith.constant 0 : index
    %c0_2 = arith.constant 0 : index
    %1 = vector.load %arg2[%c0_1, %c0_2] : memref<128x128xbf16, #tpu.memory_space<vmem>>, vector<128x128xbf16>
    %cst = arith.constant dense<0.000000e+00> : vector<512x128xf32>
    %2 = tpu.matmul %0, %1, %cst {dimension_numbers = #tpu.dot_dimension_numbers<[1], [0], [0], [1], [0, 0, 1, 1], [], []>} : vector<512x128xbf16>, vector<128x128xbf16>, vector<512x128xf32> -> vector<512x128xf32>
    %3 = arith.truncf %2 : vector<512x128xf32> to vector<512x128xbf16>
    %c0_3 = arith.constant 0 : index
    %c0_4 = arith.constant 0 : index
    %4 = vector.load %arg3[%c0_3, %c0_4] : memref<512x128xbf16, #tpu.memory_space<vmem>>, vector<512x128xbf16>
    tpu.vector_store %arg3[%c0_3, %c0_4], %3 {strides = array<i32>} : memref<512x128xbf16, #tpu.memory_space<vmem>>, vector<512x128xbf16>,
    %cst_5 = arith.constant dense<0.000000e+00> : vector<128xf32>
    %5 = vector.multi_reduction <add>, %2, %cst_5 [0] : vector<512x128xf32> to vector<128xf32>
    %6 = vector.shape_cast %5 : vector<128xf32> to vector<1x128xf32>
    %c0_6 = arith.constant 0 : index
    %c0_7 = arith.constant 0 : index
    %c0_8 = arith.constant 0 : index
    %7 = vector.load %arg4[%c0_6, %c0_7, %c0_8] : memref<1x2x128xf32, #tpu.memory_space<vmem>>, vector<1x1x128xf32>
    %8 = vector.shape_cast %7 : vector<1x1x128xf32> to vector<1x128xf32>
    %9 = vector.shape_cast %6 : vector<1x128xf32> to vector<1x1x128xf32>
    tpu.vector_store %arg4[%c0_6, %c0_7, %c0_8], %9 {strides = array<i32>} : memref<1x2x128xf32, #tpu.memory_space<vmem>>, vector<1x1x128xf32>,
    %10 = arith.mulf %2, %2 : vector<512x128xf32>
    %cst_9 = arith.constant dense<0.000000e+00> : vector<128xf32>
    %11 = vector.multi_reduction <add>, %10, %cst_9 [0] : vector<512x128xf32> to vector<128xf32>
    %12 = vector.shape_cast %11 : vector<128xf32> to vector<1x128xf32>
    %c0_10 = arith.constant 0 : index
    %c1 = arith.constant 1 : index
    %c0_11 = arith.constant 0 : index
    %13 = vector.load %arg4[%c0_10, %c1, %c0_11] : memref<1x2x128xf32, #tpu.memory_space<vmem>>, vector<1x1x128xf32>
    %14 = vector.shape_cast %13 : vector<1x1x128xf32> to vector<1x128xf32>
    %15 = vector.shape_cast %12 : vector<1x128xf32> to vector<1x1x128xf32>
    tpu.vector_store %arg4[%c0_10, %c1, %c0_11], %15 {strides = array<i32>} : memref<1x2x128xf32, #tpu.memory_space<vmem>>, vector<1x1x128xf32>,
    return
  }
  func.func @transform_0(%arg0: i32) -> (i32, i32) {
    %c0_i32 = arith.constant 0 : i32
    %c0_i32_0 = arith.constant 0 : i32
    return %arg0, %c0_i32 : i32, i32
  }
  func.func @transform_1(%arg0: i32) -> (i32, i32) {
    %c0_i32 = arith.constant 0 : i32
    %c0_i32_0 = arith.constant 0 : i32
    %c0_i32_1 = arith.constant 0 : i32
    return %c0_i32, %c0_i32_0 : i32, i32
  }
  func.func @transform_2(%arg0: i32) -> (i32, i32) {
    %c0_i32 = arith.constant 0 : i32
    %c0_i32_0 = arith.constant 0 : i32
    return %arg0, %c0_i32 : i32, i32
  }
  func.func @transform_3(%arg0: i32) -> (i32, i32, i32) {
    %c0_i32 = arith.constant 0 : i32
    %c0_i32_0 = arith.constant 0 : i32
    %c0_i32_1 = arith.constant 0 : i32
    return %arg0, %c0_i32, %c0_i32_0 : i32, i32, i32
  }
}

</mosaic_0001>

<llo_original>
// kernel: tpu_custom_call.1
$region0: #{tpu_custom_call.1}
  #allocation0 [shape = 'u32[]', space=smem, size = 0x4, offset = 0x4, fixed_abs, tag = 'smem constant byte address 0x4 - core index']
  #allocation1 [shape = 'u32[72,128]{1,0:T(1,128)}', space=vmem, size = 0x9000, scoped, tag = 'internal scratch']
  %s0 = inlined_call_operand.hbm [shape: bf16[512,128], index: 0, kind: input, shape index: {}]
  %s1 = inlined_call_operand.hbm [shape: bf16[128,128], index: 1, kind: input, shape index: {}]
  %s2 = inlined_call_operand.hbm [shape: bf16[512,128], index: 2, kind: output, shape index: {0}]
  %s3 = inlined_call_operand.hbm [shape: f32[1,2,128], index: 3, kind: output, shape index: {1}]
  %4 = xla_tuple %s2, %s3
  %s5 = sld [smem:[#allocation0]]
  $region34: #{tpu_custom_call.1} parent=0
    _
  %s7 = ssub.s32 1, %s5
  %s8 = scalar_select 0, %s7, %s5
  $region1: #{tpu_custom_call.1} parent=0
    #allocation2 [shape = 'u8[131072]{0}', space=vmem, size = 0x20000, scoped, tag = 'input window, operand 0, single buffered']
    #allocation3 [shape = 's32[1]{0}', space=sflag, size = 0x4, scoped, tag = 'scoped memory for tpu_custom_call.1']
    #allocation4 [shape = 's32[1]{0}', space=sflag, size = 0x4, scoped, tag = 'scoped memory for tpu_custom_call.1']
    #allocation5 [shape = 'u8[32768]{0}', space=vmem, size = 0x8000, scoped, tag = 'input window, operand 1, single buffered']
    #allocation6 [shape = 's32[1]{0}', space=sflag, size = 0x4, scoped, tag = 'scoped memory for tpu_custom_call.1']
    #allocation7 [shape = 'u8[131072]{0}', space=vmem, size = 0x20000, scoped, tag = 'output window, operand 0, single buffered']
    #allocation8 [shape = 'u8[1024]{0}', space=vmem, size = 0x400, scoped, tag = 'output window, operand 1, single buffered']
    #allocation9 [shape = 's32[1]{0}', space=sflag, size = 0x4, scoped, tag = 'scoped memory for tpu_custom_call.1']
    %9 = vsyncpa [#allocation3], 0
    %10 = vsyncpa [#allocation6], 0
    %11 = vsyncpa [#allocation4], 0
    %12 = vsyncpa [#allocation9], 0
    // Predicated region
    $region2: #{tpu_custom_call.1} parent=1 // pred_check
      _
    $region3: #{tpu_custom_call.1} parent=1 // pred_check_branch
      %14 = sbr.rel (0) target = $region5
    $region4: #{tpu_custom_call.1} parent=1 // pred_region
      %16 = vsyncadd [#allocation3], 0
      %s17 = sshll.u32 %s0, 4
      %s18 = int_to_ptr.hbm [resolvable:$true] %s17
      %s19 = sshll.u32 [#allocation2], 4
      %s20 = int_to_ptr.vmem [resolvable:$true] %s19
      %25 = dma.hbm_to_vmem [thread:$0]  %s18, 4096, %s20, [#allocation3], 64, 64, 4
    $region5: #{tpu_custom_call.1} parent=1 // pred_fallthru
      _
    // Predicated region
    $region6: #{tpu_custom_call.1} parent=1 // pred_check
      _
    $region7: #{tpu_custom_call.1} parent=1 // pred_check_branch
      %27 = sbr.rel (0) target = $region9
    $region8: #{tpu_custom_call.1} parent=1 // pred_region
      %29 = vsyncadd [#allocation6], 0
      %s30 = sshll.u32 %s1, 4
      %s31 = int_to_ptr.hbm [resolvable:$true] %s30
      %s32 = sshll.u32 [#allocation5], 4
      %s33 = int_to_ptr.vmem [resolvable:$true] %s32
      %38 = dma.hbm_to_vmem [thread:$0]  %s31, 1024, %s33, [#allocation6], 64, 64, 4
    $region9: #{tpu_custom_call.1} parent=1 // pred_fallthru
      _
    // Predicated region
    $region10: #{tpu_custom_call.1} parent=1 // pred_check
      _
    $region11: #{tpu_custom_call.1} parent=1 // pred_check_branch
      %40 = sbr.rel (0) target = $region13
    $region12: #{tpu_custom_call.1} parent=1 // pred_region
      %42 = dma.done [#allocation3], 4096
    $region13: #{tpu_custom_call.1} parent=1 // pred_fallthru
      _
    // Predicated region
    $region14: #{tpu_custom_call.1} parent=1 // pred_check
      _
    $region15: #{tpu_custom_call.1} parent=1 // pred_check_branch
      %44 = sbr.rel (0) target = $region17
    $region16: #{tpu_custom_call.1} parent=1 // pred_region
      %46 = dma.done [#allocation6], 1024
    $region17: #{tpu_custom_call.1} parent=1 // pred_fallthru
      _
    %v47 = vld [vmem:[#allocation2] sm:$0xf]
    %v48 = vld [vmem:[#allocation2 + $0x4] sm:$0xf]
    %v49 = vld [vmem:[#allocation2 + $0x8] sm:$0xf]
    %v50 = vld [vmem:[#allocation2 + $0xc] sm:$0xf]
    %v51 = vld [vmem:[#allocation2 + $0x10] sm:$0xf]
    %v52 = vld [vmem:[#allocation2 + $0x14] sm:$0xf]
    %v53 = vld [vmem:[#allocation2 + $0x18] sm:$0xf]
    %v54 = vld [vmem:[#allocation2 + $0x1c] sm:$0xf]
    %v55 = vld [vmem:[#allocation2 + $0x20] sm:$0xf]
    %v56 = vld [vmem:[#allocation2 + $0x24] sm:$0xf]
    %v57 = vld [vmem:[#allocation2 + $0x28] sm:$0xf]
    %v58 = vld [vmem:[#allocation2 + $0x2c] sm:$0xf]
    %v59 = vld [vmem:[#allocation2 + $0x30] sm:$0xf]
    %v60 = vld [vmem:[#allocation2 + $0x34] sm:$0xf]
    %v61 = vld [vmem:[#allocation2 + $0x38] sm:$0xf]
    %v62 = vld [vmem:[#allocation2 + $0x3c] sm:$0xf]
    %v63 = vld [vmem:[#allocation2 + $0x40] sm:$0xf]
    %v64 = vld [vmem:[#allocation2 + $0x44] sm:$0xf]
    %v65 = vld [vmem:[#allocation2 + $0x48] sm:$0xf]
    %v66 = vld [vmem:[#allocation2 + $0x4c] sm:$0xf]
    %v67 = vld [vmem:[#allocation2 + $0x50] sm:$0xf]
    %v68 = vld [vmem:[#allocation2 + $0x54] sm:$0xf]
    %v69 = vld [vmem:[#allocation2 + $0x58] sm:$0xf]
    %v70 = vld [vmem:[#allocation2 + $0x5c] sm:$0xf]
    %v71 = vld [vmem:[#allocation2 + $0x60] sm:$0xf]
    %v72 = vld [vmem:[#allocation2 + $0x64] sm:$0xf]
    %v73 = vld [vmem:[#allocation2 + $0x68] sm:$0xf]
    %v74 = vld [vmem:[#allocation2 + $0x6c] sm:$0xf]
    %v75 = vld [vmem:[#allocation2 + $0x70] sm:$0xf]
    %v76 = vld [vmem:[#allocation2 + $0x74] sm:$0xf]
    %v77 = vld [vmem:[#allocation2 + $0x78] sm:$0xf]
    %v78 = vld [vmem:[#allocation2 + $0x7c] sm:$0xf]
    %v79 = vld [vmem:[#allocation2 + $0x80] sm:$0xf]
    %v80 = vld [vmem:[#allocation2 + $0x84] sm:$0xf]
    %v81 = vld [vmem:[#allocation2 + $0x88] sm:$0xf]
    %v82 = vld [vmem:[#allocation2 + $0x8c] sm:$0xf]
    %v83 = vld [vmem:[#allocation2 + $0x90] sm:$0xf]
    %v84 = vld [vmem:[#allocation2 + $0x94] sm:$0xf]
    %v85 = vld [vmem:[#allocation2 + $0x98] sm:$0xf]
    %v86 = vld [vmem:[#allocation2 + $0x9c] sm:$0xf]
    %v87 = vld [vmem:[#allocation2 + $0xa0] sm:$0xf]
    %v88 = vld [vmem:[#allocation2 + $0xa4] sm:$0xf]
    %v89 = vld [vmem:[#allocation2 + $0xa8] sm:$0xf]
    %v90 = vld [vmem:[#allocation2 + $0xac] sm:$0xf]
    %v91 = vld [vmem:[#allocation2 + $0xb0] sm:$0xf]
    %v92 = vld [vmem:[#allocation2 + $0xb4] sm:$0xf]
    %v93 = vld [vmem:[#allocation2 + $0xb8] sm:$0xf]
    %v94 = vld [vmem:[#allocation2 + $0xbc] sm:$0xf]
    %v95 = vld [vmem:[#allocation2 + $0xc0] sm:$0xf]
    %v96 = vld [vmem:[#allocation2 + $0xc4] sm:$0xf]
    %v97 = vld [vmem:[#allocation2 + $0xc8] sm:$0xf]
    %v98 = vld [vmem:[#allocation2 + $0xcc] sm:$0xf]
    %v99 = vld [vmem:[#allocation2 + $0xd0] sm:$0xf]
    %v100 = vld [vmem:[#allocation2 + $0xd4] sm:$0xf]
    %v101 = vld [vmem:[#allocation2 + $0xd8] sm:$0xf]
    %v102 = vld [vmem:[#allocation2 + $0xdc] sm:$0xf]
    %v103 = vld [vmem:[#allocation2 + $0xe0] sm:$0xf]
    %v104 = vld [vmem:[#allocation2 + $0xe4] sm:$0xf]
    %v105 = vld [vmem:[#allocation2 + $0xe8] sm:$0xf]
    %v106 = vld [vmem:[#allocation2 + $0xec] sm:$0xf]
    %v107 = vld [vmem:[#allocation2 + $0xf0] sm:$0xf]
    %v108 = vld [vmem:[#allocation2 + $0xf4] sm:$0xf]
    %v109 = vld [vmem:[#allocation2 + $0xf8] sm:$0xf]
    %v110 = vld [vmem:[#allocation2 + $0xfc] sm:$0xf]
    %v111 = vld [vmem:[#allocation5] sm:$0xf]
    %v112 = vld [vmem:[#allocation5 + $0x4] sm:$0xf]
    %v113 = vld [vmem:[#allocation5 + $0x8] sm:$0xf]
    %v114 = vld [vmem:[#allocation5 + $0xc] sm:$0xf]
    %v115 = vld [vmem:[#allocation5 + $0x10] sm:$0xf]
    %v116 = vld [vmem:[#allocation5 + $0x14] sm:$0xf]
    %v117 = vld [vmem:[#allocation5 + $0x18] sm:$0xf]
    %v118 = vld [vmem:[#allocation5 + $0x1c] sm:$0xf]
    %v119 = vld [vmem:[#allocation5 + $0x20] sm:$0xf]
    %v120 = vld [vmem:[#allocation5 + $0x24] sm:$0xf]
    %v121 = vld [vmem:[#allocation5 + $0x28] sm:$0xf]
    %v122 = vld [vmem:[#allocation5 + $0x2c] sm:$0xf]
    %v123 = vld [vmem:[#allocation5 + $0x30] sm:$0xf]
    %v124 = vld [vmem:[#allocation5 + $0x34] sm:$0xf]
    %v125 = vld [vmem:[#allocation5 + $0x38] sm:$0xf]
    %v126 = vld [vmem:[#allocation5 + $0x3c] sm:$0xf]
    %v191 = vunpack.c.l.b16 %v47
    %v192 = vunpack.c.l.b16 %v48
    %v193 = vunpack.c.l.b16 %v49
    %v194 = vunpack.c.l.b16 %v50
    %v195 = vunpack.c.l.b16 %v51
    %v196 = vunpack.c.l.b16 %v52
    %v197 = vunpack.c.l.b16 %v53
    %v198 = vunpack.c.l.b16 %v54
    %v199 = vunpack.c.l.b16 %v55
    %v200 = vunpack.c.l.b16 %v56
    %v201 = vunpack.c.l.b16 %v57
    %v202 = vunpack.c.l.b16 %v58
    %v203 = vunpack.c.l.b16 %v59
    %v204 = vunpack.c.l.b16 %v60
    %v205 = vunpack.c.l.b16 %v61
    %v206 = vunpack.c.l.b16 %v62
    %v207 = vunpack.c.l.b16 %v63
    %v208 = vunpack.c.l.b16 %v64
    %v209 = vunpack.c.l.b16 %v65
    %v210 = vunpack.c.l.b16 %v66
    %v211 = vunpack.c.l.b16 %v67
    %v212 = vunpack.c.l.b16 %v68
    %v213 = vunpack.c.l.b16 %v69
    %v214 = vunpack.c.l.b16 %v70
    %v215 = vunpack.c.l.b16 %v71
    %v216 = vunpack.c.l.b16 %v72
    %v217 = vunpack.c.l.b16 %v73
    %v218 = vunpack.c.l.b16 %v74
    %v219 = vunpack.c.l.b16 %v75
    %v220 = vunpack.c.l.b16 %v76
    %v221 = vunpack.c.l.b16 %v77
    %v222 = vunpack.c.l.b16 %v78
    %v223 = vunpack.c.l.b16 %v79
    %v224 = vunpack.c.l.b16 %v80
    %v225 = vunpack.c.l.b16 %v81
    %v226 = vunpack.c.l.b16 %v82
    %v227 = vunpack.c.l.b16 %v83
    %v228 = vunpack.c.l.b16 %v84
    %v229 = vunpack.c.l.b16 %v85
    %v230 = vunpack.c.l.b16 %v86
    %v231 = vunpack.c.l.b16 %v87
    %v232 = vunpack.c.l.b16 %v88
    %v233 = vunpack.c.l.b16 %v89
    %v234 = vunpack.c.l.b16 %v90
    %v235 = vunpack.c.l.b16 %v91
    %v236 = vunpack.c.l.b16 %v92
    %v237 = vunpack.c.l.b16 %v93
    %v238 = vunpack.c.l.b16 %v94
    %v239 = vunpack.c.l.b16 %v95
    %v240 = vunpack.c.l.b16 %v96
    %v241 = vunpack.c.l.b16 %v97
    %v242 = vunpack.c.l.b16 %v98
    %v243 = vunpack.c.l.b16 %v99
    %v244 = vunpack.c.l.b16 %v100
    %v245 = vunpack.c.l.b16 %v101
    %v246 = vunpack.c.l.b16 %v102
    %v247 = vunpack.c.l.b16 %v103
    %v248 = vunpack.c.l.b16 %v104
    %v249 = vunpack.c.l.b16 %v105
    %v250 = vunpack.c.l.b16 %v106
    %v251 = vunpack.c.l.b16 %v107
    %v252 = vunpack.c.l.b16 %v108
    %v253 = vunpack.c.l.b16 %v109
    %v254 = vunpack.c.l.b16 %v110
    %v255 = vpack.c.b16 %v192, %v191
    %v256 = vpack.c.b16 %v194, %v193
    %v257 = vpack.c.b16 %v196, %v195
    %v258 = vpack.c.b16 %v198, %v197
    %v259 = vpack.c.b16 %v200, %v199
    %v260 = vpack.c.b16 %v202, %v201
    %v261 = vpack.c.b16 %v204, %v203
    %v262 = vpack.c.b16 %v206, %v205
    %v263 = vpack.c.b16 %v208, %v207
    %v264 = vpack.c.b16 %v210, %v209
    %v265 = vpack.c.b16 %v212, %v211
    %v266 = vpack.c.b16 %v214, %v213
    %v267 = vpack.c.b16 %v216, %v215
    %v268 = vpack.c.b16 %v218, %v217
    %v269 = vpack.c.b16 %v220, %v219
    %v270 = vpack.c.b16 %v222, %v221
    %v271 = vpack.c.b16 %v224, %v223
    %v272 = vpack.c.b16 %v226, %v225
    %v273 = vpack.c.b16 %v228, %v227
    %v274 = vpack.c.b16 %v230, %v229
    %v275 = vpack.c.b16 %v232, %v231
    %v276 = vpack.c.b16 %v234, %v233
    %v277 = vpack.c.b16 %v236, %v235
    %v278 = vpack.c.b16 %v238, %v237
    %v279 = vpack.c.b16 %v240, %v239
    %v280 = vpack.c.b16 %v242, %v241
    %v281 = vpack.c.b16 %v244, %v243
    %v282 = vpack.c.b16 %v246, %v245
    %v283 = vpack.c.b16 %v248, %v247
    %v284 = vpack.c.b16 %v250, %v249
    %v285 = vpack.c.b16 %v252, %v251
    %v286 = vpack.c.b16 %v254, %v253
    %v335 = vunpack.c.l.b16 %v111
    %v336 = vunpack.c.l.b16 %v112
    %v337 = vunpack.c.l.b16 %v113
    %v338 = vunpack.c.l.b16 %v114
    %v339 = vunpack.c.l.b16 %v115
    %v340 = vunpack.c.l.b16 %v116
    %v341 = vunpack.c.l.b16 %v117
    %v342 = vunpack.c.l.b16 %v118
    %v343 = vunpack.c.l.b16 %v119
    %v344 = vunpack.c.l.b16 %v120
    %v345 = vunpack.c.l.b16 %v121
    %v346 = vunpack.c.l.b16 %v122
    %v347 = vunpack.c.l.b16 %v123
    %v348 = vunpack.c.l.b16 %v124
    %v349 = vunpack.c.l.b16 %v125
    %v350 = vunpack.c.l.b16 %v126
    %v351 = vpack.c.b16 %v336, %v335
    %v352 = vpack.c.b16 %v338, %v337
    %v353 = vpack.c.b16 %v340, %v339
    %v354 = vpack.c.b16 %v342, %v341
    %v355 = vpack.c.b16 %v344, %v343
    %v356 = vpack.c.b16 %v346, %v345
    %v357 = vpack.c.b16 %v348, %v347
    %v358 = vpack.c.b16 %v350, %v349
    %367 = vmatpush.bf16.msra.mxu0 %v358
    %368 = vmatpush.bf16.msra.mxu0 %v357
    %369 = vmatpush.bf16.msra.mxu0 %v356
    %370 = vmatpush.bf16.msra.mxu0 %v355
    %371 = vmatpush.bf16.msra.mxu0 %v354
    %372 = vmatpush.bf16.msra.mxu0 %v353
    %373 = vmatpush.bf16.msra.mxu0 %v352
    %374 = vmatpush.bf16.msra.mxu0 %v351
    %375 = vmatmul.bf16.gmra.mxu0 %v255
    %v376 = vpop.f32.mrf.mxu0
    %v377 = vadd.f32 0.0, %v376
    %v378 = vpop.f32.mrf.mxu0
    %v379 = vadd.f32 0.0, %v378
    %380 = vmatmul.bf16.gmra.mxu0 %v256
    %v381 = vpop.f32.mrf.mxu0
    %v382 = vadd.f32 0.0, %v381
    %v383 = vpop.f32.mrf.mxu0
    %v384 = vadd.f32 0.0, %v383
    %385 = vmatmul.bf16.gmra.mxu0 %v257
    %v386 = vpop.f32.mrf.mxu0
    %v387 = vadd.f32 0.0, %v386
    %v388 = vpop.f32.mrf.mxu0
    %v389 = vadd.f32 0.0, %v388
    %390 = vmatmul.bf16.gmra.mxu0 %v258
    %v391 = vpop.f32.mrf.mxu0
    %v392 = vadd.f32 0.0, %v391
    %v393 = vpop.f32.mrf.mxu0
    %v394 = vadd.f32 0.0, %v393
    %395 = vmatmul.bf16.gmra.mxu0 %v259
    %v396 = vpop.f32.mrf.mxu0
    %v397 = vadd.f32 0.0, %v396
    %v398 = vpop.f32.mrf.mxu0
    %v399 = vadd.f32 0.0, %v398
    %400 = vmatmul.bf16.gmra.mxu0 %v260
    %v401 = vpop.f32.mrf.mxu0
    %v402 = vadd.f32 0.0, %v401
    %v403 = vpop.f32.mrf.mxu0
    %v404 = vadd.f32 0.0, %v403
    %405 = vmatmul.bf16.gmra.mxu0 %v261
    %v406 = vpop.f32.mrf.mxu0
    %v407 = vadd.f32 0.0, %v406
    %v408 = vpop.f32.mrf.mxu0
    %v409 = vadd.f32 0.0, %v408
    %410 = vmatmul.bf16.gmra.mxu0 %v262
    %v411 = vpop.f32.mrf.mxu0
    %v412 = vadd.f32 0.0, %v411
    %v413 = vpop.f32.mrf.mxu0
    %v414 = vadd.f32 0.0, %v413
    %415 = vmatmul.bf16.gmra.mxu0 %v263
    %v416 = vpop.f32.mrf.mxu0
    %v417 = vadd.f32 0.0, %v416
    %v418 = vpop.f32.mrf.mxu0
    %v419 = vadd.f32 0.0, %v418
    %420 = vmatmul.bf16.gmra.mxu0 %v264
    %v421 = vpop.f32.mrf.mxu0
    %v422 = vadd.f32 0.0, %v421
    %v423 = vpop.f32.mrf.mxu0
    %v424 = vadd.f32 0.0, %v423
    %425 = vmatmul.bf16.gmra.mxu0 %v265
    %v426 = vpop.f32.mrf.mxu0
    %v427 = vadd.f32 0.0, %v426
    %v428 = vpop.f32.mrf.mxu0
    %v429 = vadd.f32 0.0, %v428
    %430 = vmatmul.bf16.gmra.mxu0 %v266
    %v431 = vpop.f32.mrf.mxu0
    %v432 = vadd.f32 0.0, %v431
    %v433 = vpop.f32.mrf.mxu0
    %v434 = vadd.f32 0.0, %v433
    %435 = vmatmul.bf16.gmra.mxu0 %v267
    %v436 = vpop.f32.mrf.mxu0
    %v437 = vadd.f32 0.0, %v436
    %v438 = vpop.f32.mrf.mxu0
    %v439 = vadd.f32 0.0, %v438
    %440 = vmatmul.bf16.gmra.mxu0 %v268
    %v441 = vpop.f32.mrf.mxu0
    %v442 = vadd.f32 0.0, %v441
    %v443 = vpop.f32.mrf.mxu0
    %v444 = vadd.f32 0.0, %v443
    %445 = vmatmul.bf16.gmra.mxu0 %v269
    %v446 = vpop.f32.mrf.mxu0
    %v447 = vadd.f32 0.0, %v446
    %v448 = vpop.f32.mrf.mxu0
    %v449 = vadd.f32 0.0, %v448
    %450 = vmatmul.bf16.gmra.mxu0 %v270
    %v451 = vpop.f32.mrf.mxu0
    %v452 = vadd.f32 0.0, %v451
    %v453 = vpop.f32.mrf.mxu0
    %v454 = vadd.f32 0.0, %v453
    %455 = vmatmul.bf16.gmra.mxu0 %v271
    %v456 = vpop.f32.mrf.mxu0
    %v457 = vadd.f32 0.0, %v456
    %v458 = vpop.f32.mrf.mxu0
    %v459 = vadd.f32 0.0, %v458
    %460 = vmatmul.bf16.gmra.mxu0 %v272
    %v461 = vpop.f32.mrf.mxu0
    %v462 = vadd.f32 0.0, %v461
    %v463 = vpop.f32.mrf.mxu0
    %v464 = vadd.f32 0.0, %v463
    %465 = vmatmul.bf16.gmra.mxu0 %v273
    %v466 = vpop.f32.mrf.mxu0
    %v467 = vadd.f32 0.0, %v466
    %v468 = vpop.f32.mrf.mxu0
    %v469 = vadd.f32 0.0, %v468
    %470 = vmatmul.bf16.gmra.mxu0 %v274
    %v471 = vpop.f32.mrf.mxu0
    %v472 = vadd.f32 0.0, %v471
    %v473 = vpop.f32.mrf.mxu0
    %v474 = vadd.f32 0.0, %v473
    %475 = vmatmul.bf16.gmra.mxu0 %v275
    %v476 = vpop.f32.mrf.mxu0
    %v477 = vadd.f32 0.0, %v476
    %v478 = vpop.f32.mrf.mxu0
    %v479 = vadd.f32 0.0, %v478
    %480 = vmatmul.bf16.gmra.mxu0 %v276
    %v481 = vpop.f32.mrf.mxu0
    %v482 = vadd.f32 0.0, %v481
    %v483 = vpop.f32.mrf.mxu0
    %v484 = vadd.f32 0.0, %v483
    %485 = vmatmul.bf16.gmra.mxu0 %v277
    %v486 = vpop.f32.mrf.mxu0
    %v487 = vadd.f32 0.0, %v486
    %v488 = vpop.f32.mrf.mxu0
    %v489 = vadd.f32 0.0, %v488
    %490 = vmatmul.bf16.gmra.mxu0 %v278
    %v491 = vpop.f32.mrf.mxu0
    %v492 = vadd.f32 0.0, %v491
    %v493 = vpop.f32.mrf.mxu0
    %v494 = vadd.f32 0.0, %v493
    %495 = vmatmul.bf16.gmra.mxu0 %v279
    %v496 = vpop.f32.mrf.mxu0
    %v497 = vadd.f32 0.0, %v496
    %v498 = vpop.f32.mrf.mxu0
    %v499 = vadd.f32 0.0, %v498
    %500 = vmatmul.bf16.gmra.mxu0 %v280
    %v501 = vpop.f32.mrf.mxu0
    %v502 = vadd.f32 0.0, %v501
    %v503 = vpop.f32.mrf.mxu0
    %v504 = vadd.f32 0.0, %v503
    %505 = vmatmul.bf16.gmra.mxu0 %v281
    %v506 = vpop.f32.mrf.mxu0
    %v507 = vadd.f32 0.0, %v506
    %v508 = vpop.f32.mrf.mxu0
    %v509 = vadd.f32 0.0, %v508
    %510 = vmatmul.bf16.gmra.mxu0 %v282
    %v511 = vpop.f32.mrf.mxu0
    %v512 = vadd.f32 0.0, %v511
    %v513 = vpop.f32.mrf.mxu0
    %v514 = vadd.f32 0.0, %v513
    %515 = vmatmul.bf16.gmra.mxu0 %v283
    %v516 = vpop.f32.mrf.mxu0
    %v517 = vadd.f32 0.0, %v516
    %v518 = vpop.f32.mrf.mxu0
    %v519 = vadd.f32 0.0, %v518
    %520 = vmatmul.bf16.gmra.mxu0 %v284
    %v521 = vpop.f32.mrf.mxu0
    %v522 = vadd.f32 0.0, %v521
    %v523 = vpop.f32.mrf.mxu0
    %v524 = vadd.f32 0.0, %v523
    %525 = vmatmul.bf16.gmra.mxu0 %v285
    %v526 = vpop.f32.mrf.mxu0
    %v527 = vadd.f32 0.0, %v526
    %v528 = vpop.f32.mrf.mxu0
    %v529 = vadd.f32 0.0, %v528
    %530 = vmatmul.bf16.gmra.mxu0 %v286
    %v531 = vpop.f32.mrf.mxu0
    %v532 = vadd.f32 0.0, %v531
    %v533 = vpop.f32.mrf.mxu0
    %v534 = vadd.f32 0.0, %v533
    %535 = vdwg.mxu0
    %v536 = vpack.c.bf16 %v377, %v377
    %v537 = vpack.c.bf16 %v379, %v379
    %v538 = vpack.c.bf16 %v382, %v382
    %v539 = vpack.c.bf16 %v384, %v384
    %v540 = vpack.c.bf16 %v387, %v387
    %v541 = vpack.c.bf16 %v389, %v389
    %v542 = vpack.c.bf16 %v392, %v392
    %v543 = vpack.c.bf16 %v394, %v394
    %v544 = vpack.c.bf16 %v397, %v397
    %v545 = vpack.c.bf16 %v399, %v399
    %v546 = vpack.c.bf16 %v402, %v402
    %v547 = vpack.c.bf16 %v404, %v404
    %v548 = vpack.c.bf16 %v407, %v407
    %v549 = vpack.c.bf16 %v409, %v409
    %v550 = vpack.c.bf16 %v412, %v412
    %v551 = vpack.c.bf16 %v414, %v414
    %v552 = vpack.c.bf16 %v417, %v417
    %v553 = vpack.c.bf16 %v419, %v419
    %v554 = vpack.c.bf16 %v422, %v422
    %v555 = vpack.c.bf16 %v424, %v424
    %v556 = vpack.c.bf16 %v427, %v427
    %v557 = vpack.c.bf16 %v429, %v429
    %v558 = vpack.c.bf16 %v432, %v432
    %v559 = vpack.c.bf16 %v434, %v434
    %v560 = vpack.c.bf16 %v437, %v437
    %v561 = vpack.c.bf16 %v439, %v439
    %v562 = vpack.c.bf16 %v442, %v442
    %v563 = vpack.c.bf16 %v444, %v444
    %v564 = vpack.c.bf16 %v447, %v447
    %v565 = vpack.c.bf16 %v449, %v449
    %v566 = vpack.c.bf16 %v452, %v452
    %v567 = vpack.c.bf16 %v454, %v454
    %v568 = vpack.c.bf16 %v457, %v457
    %v569 = vpack.c.bf16 %v459, %v459
    %v570 = vpack.c.bf16 %v462, %v462
    %v571 = vpack.c.bf16 %v464, %v464
    %v572 = vpack.c.bf16 %v467, %v467
    %v573 = vpack.c.bf16 %v469, %v469
    %v574 = vpack.c.bf16 %v472, %v472
    %v575 = vpack.c.bf16 %v474, %v474
    %v576 = vpack.c.bf16 %v477, %v477
    %v577 = vpack.c.bf16 %v479, %v479
    %v578 = vpack.c.bf16 %v482, %v482
    %v579 = vpack.c.bf16 %v484, %v484
    %v580 = vpack.c.bf16 %v487, %v487
    %v581 = vpack.c.bf16 %v489, %v489
    %v582 = vpack.c.bf16 %v492, %v492
    %v583 = vpack.c.bf16 %v494, %v494
    %v584 = vpack.c.bf16 %v497, %v497
    %v585 = vpack.c.bf16 %v499, %v499
    %v586 = vpack.c.bf16 %v502, %v502
    %v587 = vpack.c.bf16 %v504, %v504
    %v588 = vpack.c.bf16 %v507, %v507
    %v589 = vpack.c.bf16 %v509, %v509
    %v590 = vpack.c.bf16 %v512, %v512
    %v591 = vpack.c.bf16 %v514, %v514
    %v592 = vpack.c.bf16 %v517, %v517
    %v593 = vpack.c.bf16 %v519, %v519
    %v594 = vpack.c.bf16 %v522, %v522
    %v595 = vpack.c.bf16 %v524, %v524
    %v596 = vpack.c.bf16 %v527, %v527
    %v597 = vpack.c.bf16 %v529, %v529
    %v598 = vpack.c.bf16 %v532, %v532
    %v599 = vpack.c.bf16 %v534, %v534
    %600 = vst [vmem:[#allocation7] sm:$0xf] %v536
    %601 = vst [vmem:[#allocation7 + $0x4] sm:$0xf] %v537
    %602 = vst [vmem:[#allocation7 + $0x8] sm:$0xf] %v538
    %603 = vst [vmem:[#allocation7 + $0xc] sm:$0xf] %v539
    %604 = vst [vmem:[#allocation7 + $0x10] sm:$0xf] %v540
    %605 = vst [vmem:[#allocation7 + $0x14] sm:$0xf] %v541
    %606 = vst [vmem:[#allocation7 + $0x18] sm:$0xf] %v542
    %607 = vst [vmem:[#allocation7 + $0x1c] sm:$0xf] %v543
    %608 = vst [vmem:[#allocation7 + $0x20] sm:$0xf] %v544
    %609 = vst [vmem:[#allocation7 + $0x24] sm:$0xf] %v545
    %610 = vst [vmem:[#allocation7 + $0x28] sm:$0xf] %v546
    %611 = vst [vmem:[#allocation7 + $0x2c] sm:$0xf] %v547
    %612 = vst [vmem:[#allocation7 + $0x30] sm:$0xf] %v548
    %613 = vst [vmem:[#allocation7 + $0x34] sm:$0xf] %v549
    %614 = vst [vmem:[#allocation7 + $0x38] sm:$0xf] %v550
    %615 = vst [vmem:[#allocation7 + $0x3c] sm:$0xf] %v551
    %616 = vst [vmem:[#allocation7 + $0x40] sm:$0xf] %v552
    %617 = vst [vmem:[#allocation7 + $0x44] sm:$0xf] %v553
    %618 = vst [vmem:[#allocation7 + $0x48] sm:$0xf] %v554
    %619 = vst [vmem:[#allocation7 + $0x4c] sm:$0xf] %v555
    %620 = vst [vmem:[#allocation7 + $0x50] sm:$0xf] %v556
    %621 = vst [vmem:[#allocation7 + $0x54] sm:$0xf] %v557
    %622 = vst [vmem:[#allocation7 + $0x58] sm:$0xf] %v558
    %623 = vst [vmem:[#allocation7 + $0x5c] sm:$0xf] %v559
    %624 = vst [vmem:[#allocation7 + $0x60] sm:$0xf] %v560
    %625 = vst [vmem:[#allocation7 + $0x64] sm:$0xf] %v561
    %626 = vst [vmem:[#allocation7 + $0x68] sm:$0xf] %v562
    %627 = vst [vmem:[#allocation7 + $0x6c] sm:$0xf] %v563
    %628 = vst [vmem:[#allocation7 + $0x70] sm:$0xf] %v564
    %629 = vst [vmem:[#allocation7 + $0x74] sm:$0xf] %v565
    %630 = vst [vmem:[#allocation7 + $0x78] sm:$0xf] %v566
    %631 = vst [vmem:[#allocation7 + $0x7c] sm:$0xf] %v567
    %632 = vst [vmem:[#allocation7 + $0x80] sm:$0xf] %v568
    %633 = vst [vmem:[#allocation7 + $0x84] sm:$0xf] %v569
    %634 = vst [vmem:[#allocation7 + $0x88] sm:$0xf] %v570
    %635 = vst [vmem:[#allocation7 + $0x8c] sm:$0xf] %v571
    %636 = vst [vmem:[#allocation7 + $0x90] sm:$0xf] %v572
    %637 = vst [vmem:[#allocation7 + $0x94] sm:$0xf] %v573
    %638 = vst [vmem:[#allocation7 + $0x98] sm:$0xf] %v574
    %639 = vst [vmem:[#allocation7 + $0x9c] sm:$0xf] %v575
    %640 = vst [vmem:[#allocation7 + $0xa0] sm:$0xf] %v576
    %641 = vst [vmem:[#allocation7 + $0xa4] sm:$0xf] %v577
    %642 = vst [vmem:[#allocation7 + $0xa8] sm:$0xf] %v578
    %643 = vst [vmem:[#allocation7 + $0xac] sm:$0xf] %v579
    %644 = vst [vmem:[#allocation7 + $0xb0] sm:$0xf] %v580
    %645 = vst [vmem:[#allocation7 + $0xb4] sm:$0xf] %v581
    %646 = vst [vmem:[#allocation7 + $0xb8] sm:$0xf] %v582
    %647 = vst [vmem:[#allocation7 + $0xbc] sm:$0xf] %v583
    %648 = vst [vmem:[#allocation7 + $0xc0] sm:$0xf] %v584
    %649 = vst [vmem:[#allocation7 + $0xc4] sm:$0xf] %v585
    %650 = vst [vmem:[#allocation7 + $0xc8] sm:$0xf] %v586
    %651 = vst [vmem:[#allocation7 + $0xcc] sm:$0xf] %v587
    %652 = vst [vmem:[#allocation7 + $0xd0] sm:$0xf] %v588
    %653 = vst [vmem:[#allocation7 + $0xd4] sm:$0xf] %v589
    %654 = vst [vmem:[#allocation7 + $0xd8] sm:$0xf] %v590
    %655 = vst [vmem:[#allocation7 + $0xdc] sm:$0xf] %v591
    %656 = vst [vmem:[#allocation7 + $0xe0] sm:$0xf] %v592
    %657 = vst [vmem:[#allocation7 + $0xe4] sm:$0xf] %v593
    %658 = vst [vmem:[#allocation7 + $0xe8] sm:$0xf] %v594
    %659 = vst [vmem:[#allocation7 + $0xec] sm:$0xf] %v595
    %660 = vst [vmem:[#allocation7 + $0xf0] sm:$0xf] %v596
    %661 = vst [vmem:[#allocation7 + $0xf4] sm:$0xf] %v597
    %662 = vst [vmem:[#allocation7 + $0xf8] sm:$0xf] %v598
    %663 = vst [vmem:[#allocation7 + $0xfc] sm:$0xf] %v599
    %v664 = vadd.f32 %v377, %v379
    %v665 = vadd.f32 %v664, %v382
    %v666 = vadd.f32 %v665, %v384
    %v667 = vadd.f32 %v666, %v387
    %v668 = vadd.f32 %v667, %v389
    %v669 = vadd.f32 %v668, %v392
    %v670 = vadd.f32 %v669, %v394
    %v671 = vadd.f32 %v670, %v397
    %v672 = vadd.f32 %v671, %v399
    %v673 = vadd.f32 %v672, %v402
    %v674 = vadd.f32 %v673, %v404
    %v675 = vadd.f32 %v674, %v407
    %v676 = vadd.f32 %v675, %v409
    %v677 = vadd.f32 %v676, %v412
    %v678 = vadd.f32 %v677, %v414
    %v679 = vadd.f32 %v678, %v417
    %v680 = vadd.f32 %v679, %v419
    %v681 = vadd.f32 %v680, %v422
    %v682 = vadd.f32 %v681, %v424
    %v683 = vadd.f32 %v682, %v427
    %v684 = vadd.f32 %v683, %v429
    %v685 = vadd.f32 %v684, %v432
    %v686 = vadd.f32 %v685, %v434
    %v687 = vadd.f32 %v686, %v437
    %v688 = vadd.f32 %v687, %v439
    %v689 = vadd.f32 %v688, %v442
    %v690 = vadd.f32 %v689, %v444
    %v691 = vadd.f32 %v690, %v447
    %v692 = vadd.f32 %v691, %v449
    %v693 = vadd.f32 %v692, %v452
    %v694 = vadd.f32 %v693, %v454
    %v695 = vadd.f32 %v694, %v457
    %v696 = vadd.f32 %v695, %v459
    %v697 = vadd.f32 %v696, %v462
    %v698 = vadd.f32 %v697, %v464
    %v699 = vadd.f32 %v698, %v467
    %v700 = vadd.f32 %v699, %v469
    %v701 = vadd.f32 %v700, %v472
    %v702 = vadd.f32 %v701, %v474
    %v703 = vadd.f32 %v702, %v477
    %v704 = vadd.f32 %v703, %v479
    %v705 = vadd.f32 %v704, %v482
    %v706 = vadd.f32 %v705, %v484
    %v707 = vadd.f32 %v706, %v487
    %v708 = vadd.f32 %v707, %v489
    %v709 = vadd.f32 %v708, %v492
    %v710 = vadd.f32 %v709, %v494
    %v711 = vadd.f32 %v710, %v497
    %v712 = vadd.f32 %v711, %v499
    %v713 = vadd.f32 %v712, %v502
    %v714 = vadd.f32 %v713, %v504
    %v715 = vadd.f32 %v714, %v507
    %v716 = vadd.f32 %v715, %v509
    %v717 = vadd.f32 %v716, %v512
    %v718 = vadd.f32 %v717, %v514
    %v719 = vadd.f32 %v718, %v517
    %v720 = vadd.f32 %v719, %v519
    %v721 = vadd.f32 %v720, %v522
    %v722 = vadd.f32 %v721, %v524
    %v723 = vadd.f32 %v722, %v527
    %v724 = vadd.f32 %v723, %v529
    %v725 = vadd.f32 %v724, %v532
    %v726 = vadd.f32 %v725, %v534
    %v727 = vrot.slane %v726, 4
    %v728 = vadd.f32 %v726, %v727
    %v729 = vrot.slane %v728, 2
    %v730 = vadd.f32 %v728, %v729
    %v731 = vrot.slane %v730, 1
    %v732 = vadd.f32 %v730, %v731
    %733 = vst [vmem:[#allocation8] sm:$0x1] %v732
    %v734 = vmul.f32 %v377, %v377
    %v735 = vmul.f32 %v379, %v379
    %v736 = vmul.f32 %v382, %v382
    %v737 = vmul.f32 %v384, %v384
    %v738 = vmul.f32 %v387, %v387
    %v739 = vmul.f32 %v389, %v389
    %v740 = vmul.f32 %v392, %v392
    %v741 = vmul.f32 %v394, %v394
    %v742 = vmul.f32 %v397, %v397
    %v743 = vmul.f32 %v399, %v399
    %v744 = vmul.f32 %v402, %v402
    %v745 = vmul.f32 %v404, %v404
    %v746 = vmul.f32 %v407, %v407
    %v747 = vmul.f32 %v409, %v409
    %v748 = vmul.f32 %v412, %v412
    %v749 = vmul.f32 %v414, %v414
    %v750 = vmul.f32 %v417, %v417
    %v751 = vmul.f32 %v419, %v419
    %v752 = vmul.f32 %v422, %v422
    %v753 = vmul.f32 %v424, %v424
    %v754 = vmul.f32 %v427, %v427
    %v755 = vmul.f32 %v429, %v429
    %v756 = vmul.f32 %v432, %v432
    %v757 = vmul.f32 %v434, %v434
    %v758 = vmul.f32 %v437, %v437
    %v759 = vmul.f32 %v439, %v439
    %v760 = vmul.f32 %v442, %v442
    %v761 = vmul.f32 %v444, %v444
    %v762 = vmul.f32 %v447, %v447
    %v763 = vmul.f32 %v449, %v449
    %v764 = vmul.f32 %v452, %v452
    %v765 = vmul.f32 %v454, %v454
    %v766 = vmul.f32 %v457, %v457
    %v767 = vmul.f32 %v459, %v459
    %v768 = vmul.f32 %v462, %v462
    %v769 = vmul.f32 %v464, %v464
    %v770 = vmul.f32 %v467, %v467
    %v771 = vmul.f32 %v469, %v469
    %v772 = vmul.f32 %v472, %v472
    %v773 = vmul.f32 %v474, %v474
    %v774 = vmul.f32 %v477, %v477
    %v775 = vmul.f32 %v479, %v479
    %v776 = vmul.f32 %v482, %v482
    %v777 = vmul.f32 %v484, %v484
    %v778 = vmul.f32 %v487, %v487
    %v779 = vmul.f32 %v489, %v489
    %v780 = vmul.f32 %v492, %v492
    %v781 = vmul.f32 %v494, %v494
    %v782 = vmul.f32 %v497, %v497
    %v783 = vmul.f32 %v499, %v499
    %v784 = vmul.f32 %v502, %v502
    %v785 = vmul.f32 %v504, %v504
    %v786 = vmul.f32 %v507, %v507
    %v787 = vmul.f32 %v509, %v509
    %v788 = vmul.f32 %v512, %v512
    %v789 = vmul.f32 %v514, %v514
    %v790 = vmul.f32 %v517, %v517
    %v791 = vmul.f32 %v519, %v519
    %v792 = vmul.f32 %v522, %v522
    %v793 = vmul.f32 %v524, %v524
    %v794 = vmul.f32 %v527, %v527
    %v795 = vmul.f32 %v529, %v529
    %v796 = vmul.f32 %v532, %v532
    %v797 = vmul.f32 %v534, %v534
    %v798 = vadd.f32 %v734, %v735
    %v799 = vadd.f32 %v798, %v736
    %v800 = vadd.f32 %v799, %v737
    %v801 = vadd.f32 %v800, %v738
    %v802 = vadd.f32 %v801, %v739
    %v803 = vadd.f32 %v802, %v740
    %v804 = vadd.f32 %v803, %v741
    %v805 = vadd.f32 %v804, %v742
    %v806 = vadd.f32 %v805, %v743
    %v807 = vadd.f32 %v806, %v744
    %v808 = vadd.f32 %v807, %v745
    %v809 = vadd.f32 %v808, %v746
    %v810 = vadd.f32 %v809, %v747
    %v811 = vadd.f32 %v810, %v748
    %v812 = vadd.f32 %v811, %v749
    %v813 = vadd.f32 %v812, %v750
    %v814 = vadd.f32 %v813, %v751
    %v815 = vadd.f32 %v814, %v752
    %v816 = vadd.f32 %v815, %v753
    %v817 = vadd.f32 %v816, %v754
    %v818 = vadd.f32 %v817, %v755
    %v819 = vadd.f32 %v818, %v756
    %v820 = vadd.f32 %v819, %v757
    %v821 = vadd.f32 %v820, %v758
    %v822 = vadd.f32 %v821, %v759
    %v823 = vadd.f32 %v822, %v760
    %v824 = vadd.f32 %v823, %v761
    %v825 = vadd.f32 %v824, %v762
    %v826 = vadd.f32 %v825, %v763
    %v827 = vadd.f32 %v826, %v764
    %v828 = vadd.f32 %v827, %v765
    %v829 = vadd.f32 %v828, %v766
    %v830 = vadd.f32 %v829, %v767
    %v831 = vadd.f32 %v830, %v768
    %v832 = vadd.f32 %v831, %v769
    %v833 = vadd.f32 %v832, %v770
    %v834 = vadd.f32 %v833, %v771
    %v835 = vadd.f32 %v834, %v772
    %v836 = vadd.f32 %v835, %v773
    %v837 = vadd.f32 %v836, %v774
    %v838 = vadd.f32 %v837, %v775
    %v839 = vadd.f32 %v838, %v776
    %v840 = vadd.f32 %v839, %v777
    %v841 = vadd.f32 %v840, %v778
    %v842 = vadd.f32 %v841, %v779
    %v843 = vadd.f32 %v842, %v780
    %v844 = vadd.f32 %v843, %v781
    %v845 = vadd.f32 %v844, %v782
    %v846 = vadd.f32 %v845, %v783
    %v847 = vadd.f32 %v846, %v784
    %v848 = vadd.f32 %v847, %v785
    %v849 = vadd.f32 %v848, %v786
    %v850 = vadd.f32 %v849, %v787
    %v851 = vadd.f32 %v850, %v788
    %v852 = vadd.f32 %v851, %v789
    %v853 = vadd.f32 %v852, %v790
    %v854 = vadd.f32 %v853, %v791
    %v855 = vadd.f32 %v854, %v792
    %v856 = vadd.f32 %v855, %v793
    %v857 = vadd.f32 %v856, %v794
    %v858 = vadd.f32 %v857, %v795
    %v859 = vadd.f32 %v858, %v796
    %v860 = vadd.f32 %v859, %v797
    %v861 = vrot.slane %v860, 4
    %v862 = vadd.f32 %v860, %v861
    %v863 = vrot.slane %v862, 2
    %v864 = vadd.f32 %v862, %v863
    %v865 = vrot.slane %v864, 1
    %v866 = vadd.f32 %v864, %v865
    %867 = vst [vmem:[#allocation8 + $0x1] sm:$0x1] %v866
    // Predicated region
    $region18: #{tpu_custom_call.1} parent=1 // pred_check
      _
    $region19: #{tpu_custom_call.1} parent=1 // pred_check_branch
      %869 = sbr.rel (0) target = $region21
    $region20: #{tpu_custom_call.1} parent=1 // pred_region
      %871 = vsyncadd [#allocation4], 0
      %s872 = sshll.u32 [#allocation7], 4
      %s873 = int_to_ptr.vmem [resolvable:$true] %s872
      %s874 = sshll.u32 %s2, 4
      %s875 = int_to_ptr.hbm [resolvable:$true] %s874
      %880 = dma.vmem_to_hbm [thread:$0]  %s873, 4096, %s875, [#allocation4], 64, 64, 4
    $region21: #{tpu_custom_call.1} parent=1 // pred_fallthru
      _
    // Predicated region
    $region22: #{tpu_custom_call.1} parent=1 // pred_check
      _
    $region23: #{tpu_custom_call.1} parent=1 // pred_check_branch
      %882 = sbr.rel (0) target = $region25
    $region24: #{tpu_custom_call.1} parent=1 // pred_region
      %884 = vsyncadd [#allocation9], 0
      %s886 = sshll.u32 [#allocation8], 4
      %s887 = int_to_ptr.vmem [resolvable:$true] %s886
      %s888 = sshll.u32 %s3, 4
      %s889 = int_to_ptr.hbm [resolvable:$true] %s888
      %891 = dma.vmem_to_hbm [thread:$0]  %s887, 32, %s889, [#allocation9]
    $region25: #{tpu_custom_call.1} parent=1 // pred_fallthru
      _
    // Predicated region
    $region26: #{tpu_custom_call.1} parent=1 // pred_check
      _
    $region27: #{tpu_custom_call.1} parent=1 // pred_check_branch
      %893 = sbr.rel (0) target = $region29
    $region28: #{tpu_custom_call.1} parent=1 // pred_region
      %895 = dma.done [#allocation4], 4096
    $region29: #{tpu_custom_call.1} parent=1 // pred_fallthru
      _
    // Predicated region
    $region30: #{tpu_custom_call.1} parent=1 // pred_check
      _
    $region31: #{tpu_custom_call.1} parent=1 // pred_check_branch
      %897 = sbr.rel (0) target = $region33
    $region32: #{tpu_custom_call.1} parent=1 // pred_region
      %899 = dma.done [#allocation9], 32
    $region33: #{tpu_custom_call.1} parent=1 // pred_fallthru
      _
    %900 = vsyncpa [#allocation3], 1
    %901 = vsyncpa [#allocation6], 1
    %902 = vsyncpa [#allocation4], 1
    %903 = vsyncpa [#allocation9], 1

</llo_original>
